<compile_context>
chip_gen: v7x
topology: tpu7x:2x2x1
jax: 0.10.0
libtpu: 0.0.40
codegen_flags: <defaults>
</compile_context>

<pallas_src>
import functools

import jax
import jax.numpy as jnp
from jax.experimental import pallas as pl
from jax.experimental.pallas import tpu as pltpu


def _round_up(x, m):
    return (x + m - 1) // m * m


# ---------------------------------------------------------------------------
# Kernels
# ---------------------------------------------------------------------------

def _mlp_kernel_resident(x_ref, w_fc_t_ref, w_proj_t_ref, o_ref):
    # Whole-weight-resident path: 1-D grid over row tiles; both weight
    # index_maps are constant, so the weights are fetched once and reused.
    h = jnp.dot(x_ref[...], w_fc_t_ref[...], preferred_element_type=jnp.float32)
    h = jnp.maximum(h, 0.0)
    h = h * h
    o_ref[...] = jnp.dot(h.astype(w_proj_t_ref.dtype), w_proj_t_ref[...],
                         preferred_element_type=jnp.float32).astype(o_ref.dtype)


def _mlp_kernel_chunked(x_ref, w_fc_t_ref, w_proj_t_ref, o_ref, acc_ref):
    # Hidden dim streamed in th-chunks (innermost reduction grid axis).
    # Conditional assign on the first chunk (no separate zero-init pass).
    hk = pl.program_id(1)

    h = jnp.dot(x_ref[...], w_fc_t_ref[...], preferred_element_type=jnp.float32)
    h = jnp.maximum(h, 0.0)
    h = h * h
    partial = jnp.dot(h.astype(w_proj_t_ref.dtype), w_proj_t_ref[...],
                      preferred_element_type=jnp.float32)

    @pl.when(hk == 0)
    def _():
        acc_ref[...] = partial

    @pl.when(hk != 0)
    def _():
        acc_ref[...] += partial

    @pl.when(hk == pl.num_programs(1) - 1)
    def _():
        o_ref[...] = acc_ref[...].astype(o_ref.dtype)


# ---------------------------------------------------------------------------
# Hardware-aware sizing
# ---------------------------------------------------------------------------

@functools.lru_cache(maxsize=1)
def _hw_info():
    """Returns (vmem_capacity_bytes, row_tile_cap) for the local TPU."""
    kind = ""
    try:
        kind = jax.devices()[0].device_kind.lower()
    except Exception:
        pass

    vmem_cap = None
    try:
        vmem_cap = int(pltpu.get_tpu_info().vmem_capacity_bytes)
    except Exception:
        vmem_cap = None
    if vmem_cap is None or vmem_cap <= 0:
        vmem_cap = (64 << 20) if "v7" in kind else (128 << 20)

    # Per-generation row-tile cap (arithmetic-intensity target on the weight
    # stream when chunking): v6e ~1024, v7x ~512 (64 MiB VMEM), v5e ~512.
    if "v7" in kind:
        tm_cap = 512
    elif "v6" in kind:
        tm_cap = 1024
    elif "v5" in kind:
        tm_cap = 512
    else:
        tm_cap = 512
    return vmem_cap, tm_cap


# ---------------------------------------------------------------------------
# Weight preparation (do this ONCE at parameter-init time)
# ---------------------------------------------------------------------------

def prepare_mlp_weights(w_fc, w_proj, compute_dtype):
    """Cast to the compute dtype, transpose to (in, out) layout, pad D/H to
    lane-dense multiples of 128.  Hoisted out of the per-call path so each
    forward does not pay a full HBM read+write over both weight matrices."""
    H, D = w_fc.shape
    assert w_proj.shape == (D, H)
    Dp = _round_up(max(D, 128), 128)
    Hp = _round_up(max(H, 128), 128)

    w_fc_t = w_fc.astype(compute_dtype).T      # (D, H)
    w_proj_t = w_proj.astype(compute_dtype).T  # (H, D)
    if (Dp, Hp) != (D, H):
        # Zero padding is exact: padded x columns hit zero weight rows, padded
        # hidden columns are zero through relu^2, padded output columns are
        # zero and sliced off.
        w_fc_t = jnp.pad(w_fc_t, ((0, Dp - D), (0, Hp - H)))
        w_proj_t = jnp.pad(w_proj_t, ((0, Hp - H), (0, Dp - D)))
    return {"w_fc_t": w_fc_t, "w_proj_t": w_proj_t, "D": D, "H": H}


# ---------------------------------------------------------------------------
# Forward
# ---------------------------------------------------------------------------

def mlp_forward(x, params, *, tm=None, th=None):
    """x: [B, T, D]; params from prepare_mlp_weights (same dtype as x)."""
    B, T, D = x.shape
    assert D == params["D"]
    w_fc_t = params["w_fc_t"]
    w_proj_t = params["w_proj_t"]
    dtype = x.dtype
    assert w_fc_t.dtype == dtype, "prepare_mlp_weights must use x.dtype"
    Dp, Hp = w_fc_t.shape

    itemsize = jnp.dtype(dtype).itemsize
    sub = 16 if itemsize == 2 else 8  # sublane granule (bf16 packs 2 rows)

    M = B * T
    vmem_cap, tm_cap = _hw_info()
    budget = vmem_cap - (12 << 20)  # headroom for compiler internal scratch

    # --- VMEM footprint models (bytes) -------------------------------------
    def resident_bytes(t):
        return (4 * Dp * Hp * itemsize          # 2 weights x 2 buffers
                + 4 * t * Dp * itemsize         # x + out tiles, double-buffered
                + 4 * t * Hp)                   # f32 hidden intermediate

    def chunk_bytes(t, c):
        return (4 * Dp * c * itemsize           # 2 weight chunks x 2 buffers
                + 4 * t * Dp * itemsize         # x + out tiles, double-buffered
                + 4 * t * Dp                    # f32 accumulator
                + 4 * t * c)                    # f32 hidden intermediate

    # --- tile selection -----------------------------------------------------
    if tm is None:
        tm_sel = min(_round_up(tm_cap, sub), _round_up(M, sub))
    else:
        tm_sel = _round_up(tm, sub)
    min_tm = min(_round_up(M, sub), 256)

    use_resident = (th is None or th == Hp) and resident_bytes(min_tm) <= budget

    if use_resident:
        th_sel = Hp
        while tm_sel > min_tm and resident_bytes(tm_sel) > budget:
            tm_sel = max(min_tm, _round_up(tm_sel // 2, sub))
        est = resident_bytes(tm_sel)
    else:
        if th is None:
            th_sel = next(c for c in (512, 384, 256, 128) if Hp % c == 0)
        else:
            th_sel = th
            assert Hp % th_sel == 0 and th_sel % 128 == 0
        while tm_sel > sub and chunk_bytes(tm_sel, th_sel) > budget:
            tm_sel = max(sub, _round_up(tm_sel // 2, sub))
        est = chunk_bytes(tm_sel, th_sel)

    Mp = _round_up(M, tm_sel)
    n_m = Mp // tm_sel
    # Even number of M tiles so v7x's two TensorCores split the parallel axis
    # evenly (at most one extra padded tile; no-op on single-TC chips).
    if n_m > 1 and n_m % 2 == 1:
        n_m += 1
        Mp = n_m * tm_sel

    x2d = x.reshape(M, D)
    if Mp != M or Dp != D:
        x2d = jnp.pad(x2d, ((0, Mp - M), (0, Dp - D)))

    # Never request more than the chip physically has (v7x = 64 MiB).
    vmem_limit = int(min(max(est + (8 << 20), 32 << 20), vmem_cap - (4 << 20)))

    if use_resident:
        out2d = pl.pallas_call(
            _mlp_kernel_resident,
            out_shape=jax.ShapeDtypeStruct((Mp, Dp), dtype),
            grid_spec=pltpu.PrefetchScalarGridSpec(
                num_scalar_prefetch=0,
                grid=(n_m,),
                in_specs=[
                    pl.BlockSpec((tm_sel, Dp), lambda i: (i, 0)),  # x rows
                    pl.BlockSpec((Dp, Hp), lambda i: (0, 0)),      # W_fc^T (resident)
                    pl.BlockSpec((Hp, Dp), lambda i: (0, 0)),      # W_proj^T (resident)
                ],
                out_specs=pl.BlockSpec((tm_sel, Dp), lambda i: (i, 0)),
            ),
            compiler_params=pltpu.CompilerParams(
                dimension_semantics=("parallel",),
                vmem_limit_bytes=vmem_limit,
            ),
        )(x2d, w_fc_t, w_proj_t)
    else:
        # TODO(synk): on v6e, if profiling shows exposed weight-chunk DMA,
        # bump the two weight BlockSpecs to pipeline_mode=pl.Buffered(3).
        out2d = pl.pallas_call(
            _mlp_kernel_chunked,
            out_shape=jax.ShapeDtypeStruct((Mp, Dp), dtype),
            grid_spec=pltpu.PrefetchScalarGridSpec(
                num_scalar_prefetch=0,
                grid=(n_m, Hp // th_sel),
                in_specs=[
                    pl.BlockSpec((tm_sel, Dp), lambda i, k: (i, 0)),  # x rows
                    pl.BlockSpec((Dp, th_sel), lambda i, k: (0, k)),  # W_fc^T chunk
                    pl.BlockSpec((th_sel, Dp), lambda i, k: (k, 0)),  # W_proj^T chunk
                ],
                out_specs=pl.BlockSpec((tm_sel, Dp), lambda i, k: (i, 0)),
                scratch_shapes=[pltpu.VMEM((tm_sel, Dp), jnp.float32)],
            ),
            compiler_params=pltpu.CompilerParams(
                dimension_semantics=("parallel", "arbitrary"),
                vmem_limit_bytes=vmem_limit,
            ),
        )(x2d, w_fc_t, w_proj_t)

    if Mp != M or Dp != D:
        out2d = out2d[:M, :D]
    return out2d.reshape(B, T, D)


def mlp_pallas(x, w_fc, w_proj, **kw):
    """Convenience one-shot entry (prepares weights inline)."""
    params = prepare_mlp_weights(w_fc, w_proj, x.dtype)
    return mlp_forward(x, params, **kw)


def mlp_reference(x, w_fc, w_proj):
    h = jnp.einsum("btd,hd->bth", x, w_fc.astype(x.dtype),
                   preferred_element_type=jnp.float32)
    h = jnp.maximum(h, 0.0) ** 2
    out = jnp.einsum("bth,dh->btd", h.astype(x.dtype), w_proj.astype(x.dtype),
                     preferred_element_type=jnp.float32)
    return out.astype(x.dtype)


if __name__ == "__main__":
    key = jax.random.PRNGKey(0)
    kx, kfc, kproj, kx2, kfc2, kproj2 = jax.random.split(key, 6)

    # ---- Test 1: config.n_embd = 32 -> hidden = 128 (resident fast path) ---
    B, T, D = 2, 8, 32
    H = 4 * D
    x = jax.random.normal(kx, (B, T, D), dtype=jnp.float32)
    w_fc = jax.random.uniform(kfc, (H, D), dtype=jnp.float32,
                              minval=-1.0 / D ** 0.5, maxval=1.0 / D ** 0.5)
    w_proj = jax.random.uniform(kproj, (D, H), dtype=jnp.float32,
                                minval=-1.0 / H ** 0.5, maxval=1.0 / H ** 0.5)
    w_proj = w_proj * 0.01  # MLP.__init__: self.c_proj.weight *= 0.01

    params_f32 = prepare_mlp_weights(w_fc, w_proj, jnp.float32)  # init-time prep
    out = mlp_forward(x, params_f32)
    jax.block_until_ready(out)
    ref = mlp_reference(x, w_fc, w_proj)
    assert out.shape == (B, T, D)
    assert jnp.allclose(out, ref, atol=1e-5, rtol=1e-5), "f32 mismatch vs reference"

    # bf16 path (CastedLinear casts weights to x.dtype).
    x_bf16 = x.astype(jnp.bfloat16)
    params_bf16 = prepare_mlp_weights(w_fc, w_proj, jnp.bfloat16)
    out_bf16 = mlp_forward(x_bf16, params_bf16)
    jax.block_until_ready(out_bf16)
    assert out_bf16.dtype == jnp.bfloat16
    assert jnp.allclose(out_bf16.astype(jnp.float32), ref, atol=3e-2, rtol=3e-1), \
        "bf16 mismatch vs reference"

    # ---- Test 2: n_embd = 128 -> hidden = 512; force the chunked path ------
    B2, T2, D2 = 2, 8, 128
    H2 = 4 * D2
    x2 = jax.random.normal(kx2, (B2, T2, D2), dtype=jnp.float32)
    w_fc2 = jax.random.uniform(kfc2, (H2, D2), dtype=jnp.float32,
                               minval=-1.0 / D2 ** 0.5, maxval=1.0 / D2 ** 0.5)
    w_proj2 = jax.random.uniform(kproj2, (D2, H2), dtype=jnp.float32,
                                 minval=-1.0 / H2 ** 0.5, maxval=1.0 / H2 ** 0.5)
    w_proj2 = w_proj2 * 0.01

    out2 = mlp_pallas(x2, w_fc2, w_proj2, th=128)  # th < H -> chunked kernel
    jax.block_until_ready(out2)
    ref2 = mlp_reference(x2, w_fc2, w_proj2)
    assert out2.shape == (B2, T2, D2)
    assert jnp.allclose(out2, ref2, atol=1e-4, rtol=1e-3), "chunked mismatch vs reference"

    print("KERNEL_OK")
</pallas_src>

<mosaic_0001>
module attributes {stable_mosaic.version = 11 : i64} {
  func.func @_mlp_kernel_resident(%arg0: i32, %arg1: memref<16x128xf32, #tpu.memory_space<vmem>>, %arg2: memref<128x128xf32, #tpu.memory_space<vmem>>, %arg3: memref<128x128xf32, #tpu.memory_space<vmem>>, %arg4: memref<16x128xf32, #tpu.memory_space<vmem>>) attributes {dimension_semantics = [#tpu.dimension_semantics<parallel>], iteration_bounds = array<i64: 1>, scalar_prefetch = 0 : i64, scratch_operands = 0 : i64, tpu.core_type = #tpu.core_type<tc>, window_params = [{transform_indices = @transform_0, window_bounds = array<i64: 16, 128>}, {pipeline_mode = #tpu.pipeline_mode<synchronous>, transform_indices = @transform_1, window_bounds = array<i64: 128, 128>}, {pipeline_mode = #tpu.pipeline_mode<synchronous>, transform_indices = @transform_2, window_bounds = array<i64: 128, 128>}, {transform_indices = @transform_3, window_bounds = array<i64: 16, 128>}]} {
    %c0 = arith.constant 0 : index
    %c0_0 = arith.constant 0 : index
    %0 = vector.load %arg1[%c0, %c0_0] : memref<16x128xf32, #tpu.memory_space<vmem>>, vector<16x128xf32>
    %c0_1 = arith.constant 0 : index
    %c0_2 = arith.constant 0 : index
    %1 = vector.load %arg2[%c0_1, %c0_2] : memref<128x128xf32, #tpu.memory_space<vmem>>, vector<128x128xf32>
    %cst = arith.constant dense<0.000000e+00> : vector<16x128xf32>
    %2 = tpu.matmul %0, %1, %cst {dimension_numbers = #tpu.dot_dimension_numbers<[1], [0], [0], [1], [0, 0, 1, 1], [], []>} : vector<16x128xf32>, vector<128x128xf32>, vector<16x128xf32> -> vector<16x128xf32>
    %cst_3 = arith.constant 0.000000e+00 : f32
    %3 = vector.broadcast %cst_3 : f32 to vector<16x128xf32>
    %4 = arith.maximumf %2, %3 : vector<16x128xf32>
    %5 = arith.mulf %4, %4 : vector<16x128xf32>
    %c0_4 = arith.constant 0 : index
    %c0_5 = arith.constant 0 : index
    %6 = vector.load %arg3[%c0_4, %c0_5] : memref<128x128xf32, #tpu.memory_space<vmem>>, vector<128x128xf32>
    %cst_6 = arith.constant dense<0.000000e+00> : vector<16x128xf32>
    %7 = tpu.matmul %5, %6, %cst_6 {dimension_numbers = #tpu.dot_dimension_numbers<[1], [0], [0], [1], [0, 0, 1, 1], [], []>} : vector<16x128xf32>, vector<128x128xf32>, vector<16x128xf32> -> vector<16x128xf32>
    %c0_7 = arith.constant 0 : index
    %c0_8 = arith.constant 0 : index
    %8 = vector.load %arg4[%c0_7, %c0_8] : memref<16x128xf32, #tpu.memory_space<vmem>>, vector<16x128xf32>
    tpu.vector_store %arg4[%c0_7, %c0_8], %7 {strides = array<i32>} : memref<16x128xf32, #tpu.memory_space<vmem>>, vector<16x128xf32>,
    return
  }
  func.func @transform_0(%arg0: i32) -> (i32, i32) {
    %c0_i32 = arith.constant 0 : i32
    %c0_i32_0 = arith.constant 0 : i32
    return %arg0, %c0_i32 : i32, i32
  }
  func.func @transform_1(%arg0: i32) -> (i32, i32) {
    %c0_i32 = arith.constant 0 : i32
    %c0_i32_0 = arith.constant 0 : i32
    %c0_i32_1 = arith.constant 0 : i32
    return %c0_i32, %c0_i32_0 : i32, i32
  }
  func.func @transform_2(%arg0: i32) -> (i32, i32) {
    %c0_i32 = arith.constant 0 : i32
    %c0_i32_0 = arith.constant 0 : i32
    %c0_i32_1 = arith.constant 0 : i32
    return %c0_i32, %c0_i32_0 : i32, i32
  }
  func.func @transform_3(%arg0: i32) -> (i32, i32) {
    %c0_i32 = arith.constant 0 : i32
    %c0_i32_0 = arith.constant 0 : i32
    return %arg0, %c0_i32 : i32, i32
  }
}

</mosaic_0001>

<llo_original>
// kernel: tpu_custom_call.1
$region0: #{tpu_custom_call.1}
  #allocation0 [shape = 'u32[]', space=smem, size = 0x4, offset = 0x4, fixed_abs, tag = 'smem constant byte address 0x4 - core index']
  #allocation1 [shape = 'u32[144,128]{1,0:T(1,128)}', space=vmem, size = 0x12000, scoped, tag = 'internal scratch']
  %s0 = inlined_call_operand.hbm [shape: f32[16,128], index: 0, kind: input, shape index: {}]
  %s1 = inlined_call_operand.hbm [shape: f32[128,128], index: 1, kind: input, shape index: {}]
  %s2 = inlined_call_operand.hbm [shape: f32[128,128], index: 2, kind: input, shape index: {}]
  %s3 = inlined_call_operand.hbm [shape: f32[16,128], index: 3, kind: output, shape index: {}]
  %s4 = sld [smem:[#allocation0]]
  $region34: #{tpu_custom_call.1} parent=0
    _
  %s6 = ssub.s32 1, %s4
  %s7 = scalar_select 0, %s6, %s4
  $region1: #{tpu_custom_call.1} parent=0
    #allocation2 [shape = 'u8[8192]{0}', space=vmem, size = 0x2000, scoped, tag = 'input window, operand 0, single buffered']
    #allocation3 [shape = 's32[1]{0}', space=sflag, size = 0x4, scoped, tag = 'scoped memory for tpu_custom_call.1']
    #allocation4 [shape = 's32[1]{0}', space=sflag, size = 0x4, scoped, tag = 'scoped memory for tpu_custom_call.1']
    #allocation5 [shape = 'u8[65536]{0}', space=vmem, size = 0x10000, scoped, tag = 'input window, operand 1, single buffered']
    #allocation6 [shape = 's32[1]{0}', space=sflag, size = 0x4, scoped, tag = 'scoped memory for tpu_custom_call.1']
    #allocation7 [shape = 'u8[65536]{0}', space=vmem, size = 0x10000, scoped, tag = 'input window, operand 2, single buffered']
    #allocation8 [shape = 'u8[8192]{0}', space=vmem, size = 0x2000, scoped, tag = 'output window, operand 0, single buffered']
    %8 = vsyncpa [#allocation3], 0
    %9 = vsyncpa [#allocation6], 0
    %10 = vsyncpa [#allocation4], 0
    // Predicated region
    $region2: #{tpu_custom_call.1} parent=1 // pred_check
      _
    $region3: #{tpu_custom_call.1} parent=1 // pred_check_branch
      %12 = sbr.rel (0) target = $region5
    $region4: #{tpu_custom_call.1} parent=1 // pred_region
      %s14 = ssub.s32 256, 256
      %15 = vsyncadd [#allocation3], %s14
      %s16 = sshll.u32 [#allocation2], 4
      %s17 = int_to_ptr.vmem [resolvable:$true] %s16
      %22 = dma.hbm_to_vmem [thread:$0]  %s0, 256, %s17, [#allocation3], 128, 128, 8
    $region5: #{tpu_custom_call.1} parent=1 // pred_fallthru
      _
    // Predicated region
    $region6: #{tpu_custom_call.1} parent=1 // pred_check
      _
    $region7: #{tpu_custom_call.1} parent=1 // pred_check_branch
      %24 = sbr.rel (0) target = $region9
    $region8: #{tpu_custom_call.1} parent=1 // pred_region
      %s26 = ssub.s32 2048, 2048
      %27 = vsyncadd [#allocation6], %s26
      %s28 = sshll.u32 [#allocation5], 4
      %s29 = int_to_ptr.vmem [resolvable:$true] %s28
      %34 = dma.hbm_to_vmem [thread:$0]  %s1, 2048, %s29, [#allocation6], 128, 128, 8
    $region9: #{tpu_custom_call.1} parent=1 // pred_fallthru
      _
    // Predicated region
    $region10: #{tpu_custom_call.1} parent=1 // pred_check
      _
    $region11: #{tpu_custom_call.1} parent=1 // pred_check_branch
      %36 = sbr.rel (0) target = $region13
    $region12: #{tpu_custom_call.1} parent=1 // pred_region
      %s38 = ssub.s32 2048, 2048
      %39 = vsyncadd [#allocation6], %s38
      %s40 = sshll.u32 [#allocation7], 4
      %s41 = int_to_ptr.vmem [resolvable:$true] %s40
      %46 = dma.hbm_to_vmem [thread:$0]  %s2, 2048, %s41, [#allocation6], 128, 128, 8
    $region13: #{tpu_custom_call.1} parent=1 // pred_fallthru
      _
    // Predicated region
    $region14: #{tpu_custom_call.1} parent=1 // pred_check
      _
    $region15: #{tpu_custom_call.1} parent=1 // pred_check_branch
      %48 = sbr.rel (0) target = $region17
    $region16: #{tpu_custom_call.1} parent=1 // pred_region
      %49 = dma.done [#allocation3], 256
    $region17: #{tpu_custom_call.1} parent=1 // pred_fallthru
      _
    // Predicated region
    $region18: #{tpu_custom_call.1} parent=1 // pred_check
      _
    $region19: #{tpu_custom_call.1} parent=1 // pred_check_branch
      %51 = sbr.rel (0) target = $region21
    $region20: #{tpu_custom_call.1} parent=1 // pred_region
      %52 = dma.done [#allocation6], 2048
    $region21: #{tpu_custom_call.1} parent=1 // pred_fallthru
      _
    // Predicated region
    $region22: #{tpu_custom_call.1} parent=1 // pred_check
      _
    $region23: #{tpu_custom_call.1} parent=1 // pred_check_branch
      %54 = sbr.rel (0) target = $region25
    $region24: #{tpu_custom_call.1} parent=1 // pred_region
      %55 = dma.done [#allocation6], 2048
    $region25: #{tpu_custom_call.1} parent=1 // pred_fallthru
      _
    %v56 = vld [vmem:[#allocation2] sm:$0xff]
    %v57 = vld [vmem:[#allocation2 + $0x8] sm:$0xff]
    %v58 = vld [vmem:[#allocation5] sm:$0xff]
    %v59 = vld [vmem:[#allocation5 + $0x8] sm:$0xff]
    %v60 = vld [vmem:[#allocation5 + $0x10] sm:$0xff]
    %v61 = vld [vmem:[#allocation5 + $0x18] sm:$0xff]
    %v62 = vld [vmem:[#allocation5 + $0x20] sm:$0xff]
    %v63 = vld [vmem:[#allocation5 + $0x28] sm:$0xff]
    %v64 = vld [vmem:[#allocation5 + $0x30] sm:$0xff]
    %v65 = vld [vmem:[#allocation5 + $0x38] sm:$0xff]
    %v66 = vld [vmem:[#allocation5 + $0x40] sm:$0xff]
    %v67 = vld [vmem:[#allocation5 + $0x48] sm:$0xff]
    %v68 = vld [vmem:[#allocation5 + $0x50] sm:$0xff]
    %v69 = vld [vmem:[#allocation5 + $0x58] sm:$0xff]
    %v70 = vld [vmem:[#allocation5 + $0x60] sm:$0xff]
    %v71 = vld [vmem:[#allocation5 + $0x68] sm:$0xff]
    %v72 = vld [vmem:[#allocation5 + $0x70] sm:$0xff]
    %v73 = vld [vmem:[#allocation5 + $0x78] sm:$0xff]
    %74 = vmatprep.subr.mxu0 0.0
    %75 = vmatpush1.msra.mxu0 %v58
    %76 = vmatprep.subr.mxu0 0.0
    %77 = vmatpush1.msra.mxu0 %v59
    %78 = vmatprep.subr.mxu0 0.0
    %79 = vmatpush1.msra.mxu0 %v60
    %80 = vmatprep.subr.mxu0 0.0
    %81 = vmatpush1.msra.mxu0 %v61
    %82 = vmatprep.subr.mxu0 0.0
    %83 = vmatpush1.msra.mxu0 %v62
    %84 = vmatprep.subr.mxu0 0.0
    %85 = vmatpush1.msra.mxu0 %v63
    %86 = vmatprep.subr.mxu0 0.0
    %87 = vmatpush1.msra.mxu0 %v64
    %88 = vmatprep.subr.mxu0 0.0
    %89 = vmatpush1.msra.mxu0 %v65
    %90 = vmatprep.subr.mxu0 0.0
    %91 = vmatpush1.msra.mxu0 %v66
    %92 = vmatprep.subr.mxu0 0.0
    %93 = vmatpush1.msra.mxu0 %v67
    %94 = vmatprep.subr.mxu0 0.0
    %95 = vmatpush1.msra.mxu0 %v68
    %96 = vmatprep.subr.mxu0 0.0
    %97 = vmatpush1.msra.mxu0 %v69
    %98 = vmatprep.subr.mxu0 0.0
    %99 = vmatpush1.msra.mxu0 %v70
    %100 = vmatprep.subr.mxu0 0.0
    %101 = vmatpush1.msra.mxu0 %v71
    %102 = vmatprep.subr.mxu0 0.0
    %103 = vmatpush1.msra.mxu0 %v72
    %104 = vmatprep.subr.mxu0 0.0
    %105 = vmatpush1.msra.mxu0 %v73
    %106 = vmatprep.subr.mxu0 0.0
    %107 = vmatpush1.msra.mxu0 0.0
    %108 = vmatprep.subr.mxu0 0.0
    %109 = vmatpush1.msra.mxu0 0.0
    %110 = vmatprep.subr.mxu0 0.0
    %111 = vmatpush1.msra.mxu0 0.0
    %112 = vmatprep.subr.mxu0 0.0
    %113 = vmatpush1.msra.mxu0 0.0
    %114 = vmatprep.subr.mxu0 0.0
    %115 = vmatpush1.msra.mxu0 0.0
    %116 = vmatprep.subr.mxu0 0.0
    %117 = vmatpush1.msra.mxu0 0.0
    %118 = vmatprep.subr.mxu0 0.0
    %119 = vmatpush1.msra.mxu0 0.0
    %120 = vmatprep.subr.mxu0 0.0
    %121 = vmatpush1.msra.mxu0 0.0
    %122 = vmatprep.subr.mxu0 0.0
    %123 = vmatpush1.msra.mxu0 0.0
    %124 = vmatprep.subr.mxu0 0.0
    %125 = vmatpush1.msra.mxu0 0.0
    %126 = vmatprep.subr.mxu0 0.0
    %127 = vmatpush1.msra.mxu0 0.0
    %128 = vmatprep.subr.mxu0 0.0
    %129 = vmatpush1.msra.mxu0 0.0
    %130 = vmatprep.subr.mxu0 0.0
    %131 = vmatpush1.msra.mxu0 0.0
    %132 = vmatprep.subr.mxu0 0.0
    %133 = vmatpush1.msra.mxu0 0.0
    %134 = vmatprep.subr.mxu0 0.0
    %135 = vmatpush1.msra.mxu0 0.0
    %136 = vmatprep.subr.mxu0 0.0
    %137 = vmatpush1.msra.mxu0 0.0
    %138 = vmatprep.mubr.f32.mxu0 0.0
    %139 = vmatmul.mubr.f32.gmra.mrb[0].mxu0 %v56
    %v140 = vpop.f32.mrb[0].mxu0
    %v141 = vadd.f32 0.0, %v140
    %v142 = vpop.f32.mrb[0].mxu0
    %143 = vmatprep.mubr.f32.mxu0 0.0
    %144 = vmatmul.mubr.f32.gmra.mrb[0].mxu0 %v57
    %v145 = vpop.f32.mrb[0].mxu0
    %v146 = vadd.f32 0.0, %v145
    %v147 = vpop.f32.mrb[0].mxu0
    %148 = vdwg.mxu0
    %v149 = vmax.f32 %v141, 0.0
    %v150 = vmax.f32 %v146, 0.0
    %v151 = vmul.f32 %v149, %v149
    %v152 = vmul.f32 %v150, %v150
    %v153 = vld [vmem:[#allocation7] sm:$0xff]
    %v154 = vld [vmem:[#allocation7 + $0x8] sm:$0xff]
    %v155 = vld [vmem:[#allocation7 + $0x10] sm:$0xff]
    %v156 = vld [vmem:[#allocation7 + $0x18] sm:$0xff]
    %v157 = vld [vmem:[#allocation7 + $0x20] sm:$0xff]
    %v158 = vld [vmem:[#allocation7 + $0x28] sm:$0xff]
    %v159 = vld [vmem:[#allocation7 + $0x30] sm:$0xff]
    %v160 = vld [vmem:[#allocation7 + $0x38] sm:$0xff]
    %v161 = vld [vmem:[#allocation7 + $0x40] sm:$0xff]
    %v162 = vld [vmem:[#allocation7 + $0x48] sm:$0xff]
    %v163 = vld [vmem:[#allocation7 + $0x50] sm:$0xff]
    %v164 = vld [vmem:[#allocation7 + $0x58] sm:$0xff]
    %v165 = vld [vmem:[#allocation7 + $0x60] sm:$0xff]
    %v166 = vld [vmem:[#allocation7 + $0x68] sm:$0xff]
    %v167 = vld [vmem:[#allocation7 + $0x70] sm:$0xff]
    %v168 = vld [vmem:[#allocation7 + $0x78] sm:$0xff]
    %169 = vmatprep.subr.mxu0 0.0
    %170 = vmatpush1.msra.mxu0 %v153
    %171 = vmatprep.subr.mxu0 0.0
    %172 = vmatpush1.msra.mxu0 %v154
    %173 = vmatprep.subr.mxu0 0.0
    %174 = vmatpush1.msra.mxu0 %v155
    %175 = vmatprep.subr.mxu0 0.0
    %176 = vmatpush1.msra.mxu0 %v156
    %177 = vmatprep.subr.mxu0 0.0
    %178 = vmatpush1.msra.mxu0 %v157
    %179 = vmatprep.subr.mxu0 0.0
    %180 = vmatpush1.msra.mxu0 %v158
    %181 = vmatprep.subr.mxu0 0.0
    %182 = vmatpush1.msra.mxu0 %v159
    %183 = vmatprep.subr.mxu0 0.0
    %184 = vmatpush1.msra.mxu0 %v160
    %185 = vmatprep.subr.mxu0 0.0
    %186 = vmatpush1.msra.mxu0 %v161
    %187 = vmatprep.subr.mxu0 0.0
    %188 = vmatpush1.msra.mxu0 %v162
    %189 = vmatprep.subr.mxu0 0.0
    %190 = vmatpush1.msra.mxu0 %v163
    %191 = vmatprep.subr.mxu0 0.0
    %192 = vmatpush1.msra.mxu0 %v164
    %193 = vmatprep.subr.mxu0 0.0
    %194 = vmatpush1.msra.mxu0 %v165
    %195 = vmatprep.subr.mxu0 0.0
    %196 = vmatpush1.msra.mxu0 %v166
    %197 = vmatprep.subr.mxu0 0.0
    %198 = vmatpush1.msra.mxu0 %v167
    %199 = vmatprep.subr.mxu0 0.0
    %200 = vmatpush1.msra.mxu0 %v168
    %201 = vmatprep.subr.mxu0 0.0
    %202 = vmatpush1.msra.mxu0 0.0
    %203 = vmatprep.subr.mxu0 0.0
    %204 = vmatpush1.msra.mxu0 0.0
    %205 = vmatprep.subr.mxu0 0.0
    %206 = vmatpush1.msra.mxu0 0.0
    %207 = vmatprep.subr.mxu0 0.0
    %208 = vmatpush1.msra.mxu0 0.0
    %209 = vmatprep.subr.mxu0 0.0
    %210 = vmatpush1.msra.mxu0 0.0
    %211 = vmatprep.subr.mxu0 0.0
    %212 = vmatpush1.msra.mxu0 0.0
    %213 = vmatprep.subr.mxu0 0.0
    %214 = vmatpush1.msra.mxu0 0.0
    %215 = vmatprep.subr.mxu0 0.0
    %216 = vmatpush1.msra.mxu0 0.0
    %217 = vmatprep.subr.mxu0 0.0
    %218 = vmatpush1.msra.mxu0 0.0
    %219 = vmatprep.subr.mxu0 0.0
    %220 = vmatpush1.msra.mxu0 0.0
    %221 = vmatprep.subr.mxu0 0.0
    %222 = vmatpush1.msra.mxu0 0.0
    %223 = vmatprep.subr.mxu0 0.0
    %224 = vmatpush1.msra.mxu0 0.0
    %225 = vmatprep.subr.mxu0 0.0
    %226 = vmatpush1.msra.mxu0 0.0
    %227 = vmatprep.subr.mxu0 0.0
    %228 = vmatpush1.msra.mxu0 0.0
    %229 = vmatprep.subr.mxu0 0.0
    %230 = vmatpush1.msra.mxu0 0.0
    %231 = vmatprep.subr.mxu0 0.0
    %232 = vmatpush1.msra.mxu0 0.0
    %233 = vmatprep.mubr.f32.mxu0 0.0
    %234 = vmatmul.mubr.f32.gmra.mrb[0].mxu0 %v151
    %v235 = vpop.f32.mrb[0].mxu0
    %v236 = vadd.f32 0.0, %v235
    %v237 = vpop.f32.mrb[0].mxu0
    %238 = vmatprep.mubr.f32.mxu0 0.0
    %239 = vmatmul.mubr.f32.gmra.mrb[0].mxu0 %v152
    %v240 = vpop.f32.mrb[0].mxu0
    %v241 = vadd.f32 0.0, %v240
    %v242 = vpop.f32.mrb[0].mxu0
    %243 = vdwg.mxu0
    %244 = vst [vmem:[#allocation8] sm:$0xff] %v236
    %245 = vst [vmem:[#allocation8 + $0x8] sm:$0xff] %v241
    // Predicated region
    $region26: #{tpu_custom_call.1} parent=1 // pred_check
      _
    $region27: #{tpu_custom_call.1} parent=1 // pred_check_branch
      %247 = sbr.rel (0) target = $region29
    $region28: #{tpu_custom_call.1} parent=1 // pred_region
      %s249 = ssub.s32 256, 256
      %250 = vsyncadd [#allocation4], %s249
      %s251 = sshll.u32 [#allocation8], 4
      %s252 = int_to_ptr.vmem [resolvable:$true] %s251
      %257 = dma.vmem_to_hbm [thread:$0]  %s252, 256, %s3, [#allocation4], 128, 128, 8
    $region29: #{tpu_custom_call.1} parent=1 // pred_fallthru
      _
    // Predicated region
    $region30: #{tpu_custom_call.1} parent=1 // pred_check
      _
    $region31: #{tpu_custom_call.1} parent=1 // pred_check_branch
      %259 = sbr.rel (0) target = $region33
    $region32: #{tpu_custom_call.1} parent=1 // pred_region
      %260 = dma.done [#allocation4], 256
    $region33: #{tpu_custom_call.1} parent=1 // pred_fallthru
      _
    %261 = vsyncpa [#allocation3], 1
    %262 = vsyncpa [#allocation6], 1
    %263 = vsyncpa [#allocation4], 1

</llo_original>
